<compile_context>
chip_gen: v7x
topology: tpu7x:2x2x1
jax: 0.10.0
libtpu: 0.0.40
codegen_flags: <defaults>
</compile_context>

<pallas_src>
import functools

import jax
import jax.numpy as jnp
from jax.experimental import pallas as pl
from jax.experimental.pallas import tpu as pltpu

IN_DIM = 900
HID_DIM = 300
OUT_DIM = 5
OUT_PAD = 128      # lane-dense padded output width
TB_MAX = 1024      # batch tile: fits default scoped VMEM on v5e/v6e/v7x


def _round_up(x, m):
    return (x + m - 1) // m * m


def _mlp_kernel(x_ref, w1_ref, b1_ref, w2_ref, b2_ref, o_ref):
    # x_ref:  (TB, 900)  bf16     w1_ref: (900, 300) bf16   b1_ref: (1, 300) f32
    # w2_ref: (300, 128) f32      b2_ref: (1, 128)   f32    o_ref:  (TB, 128) f32
    # fcn1: bf16 inputs, f32 MXU accumulate
    h = jnp.dot(x_ref[...], w1_ref[...], preferred_element_type=jnp.float32)
    h = jnp.maximum(h + b1_ref[...], 0.0)          # bias + ReLU in f32 (VPU)
    # dropout(p=0.2) -> identity in eval mode
    # fcn2: small f32 matmul, lane-dense (128-wide) output
    out = jnp.dot(h, w2_ref[...], preferred_element_type=jnp.float32)
    o_ref[...] = (out + b2_ref[...]).astype(o_ref.dtype)


@functools.partial(jax.jit, static_argnames=())
def classification_model_forward(x, w1, b1, w2, b2):
    """x: (B, 900); w1: (900, 300); b1: (1, 300); w2: (300, 5); b2: (1, 5).

    Weights are stored as (in_features, out_features), i.e. the transpose of
    PyTorch's nn.Linear weight, so the kernel computes x @ W + b.
    Returns (B, 5) float32.
    """
    B = x.shape[0]

    # Mirror x.float(), then drop to bf16 for the HBM-bound first matmul.
    x32 = x.astype(jnp.float32)
    x_bf16 = x32.astype(jnp.bfloat16)
    w1_bf16 = w1.astype(jnp.bfloat16)
    b1_f32 = b1.astype(jnp.float32)

    # Zero-pad fcn2 to a lane-dense 128-wide output.
    w2_pad = jnp.zeros((HID_DIM, OUT_PAD), jnp.float32).at[:, :OUT_DIM].set(
        w2.astype(jnp.float32))
    b2_pad = jnp.zeros((1, OUT_PAD), jnp.float32).at[:, :OUT_DIM].set(
        b2.astype(jnp.float32))

    # Pad batch to a multiple of 8 sublanes; pick the batch tile.
    b_pad = _round_up(B, 8)
    if b_pad != B:
        x_bf16 = jnp.pad(x_bf16, ((0, b_pad - B), (0, 0)))
    tb = min(TB_MAX, b_pad)
    grid = (pl.cdiv(b_pad, tb),)

    cost = pl.CostEstimate(
        flops=2 * b_pad * (IN_DIM * HID_DIM + HID_DIM * OUT_PAD),
        transcendentals=0,
        bytes_accessed=(b_pad * IN_DIM * 2          # x (bf16)
                        + IN_DIM * HID_DIM * 2      # w1 (bf16)
                        + HID_DIM * OUT_PAD * 4     # w2
                        + b_pad * OUT_PAD * 4),     # out
    )

    out_pad = pl.pallas_call(
        _mlp_kernel,
        out_shape=jax.ShapeDtypeStruct((b_pad, OUT_PAD), jnp.float32),
        grid_spec=pltpu.PrefetchScalarGridSpec(
            num_scalar_prefetch=0,
            grid=grid,
            in_specs=[
                pl.BlockSpec((tb, IN_DIM), lambda i: (i, 0)),        # x tile per step
                pl.BlockSpec((IN_DIM, HID_DIM), lambda i: (0, 0)),   # w1 resident
                pl.BlockSpec((1, HID_DIM), lambda i: (0, 0)),        # b1 resident
                pl.BlockSpec((HID_DIM, OUT_PAD), lambda i: (0, 0)),  # w2 resident
                pl.BlockSpec((1, OUT_PAD), lambda i: (0, 0)),        # b2 resident
            ],
            out_specs=pl.BlockSpec((tb, OUT_PAD), lambda i: (i, 0)),
        ),
        compiler_params=pltpu.CompilerParams(
            dimension_semantics=("parallel",),   # batch tiles are independent
        ),
        cost_estimate=cost,
    )(x_bf16, w1_bf16, b1_f32, w2_pad, b2_pad)

    return out_pad[:B, :OUT_DIM]


def init_params(key):
    """Deterministic parameter init matching nn.Linear shapes.
    PyTorch stores W as (out, in); we store the transpose (in, out)."""
    k1, k2, k3, k4 = jax.random.split(key, 4)
    lim1 = 1.0 / jnp.sqrt(IN_DIM)
    lim2 = 1.0 / jnp.sqrt(HID_DIM)
    w1 = jax.random.uniform(k1, (IN_DIM, HID_DIM), jnp.float32, -lim1, lim1)
    b1 = jax.random.uniform(k2, (1, HID_DIM), jnp.float32, -lim1, lim1)
    w2 = jax.random.uniform(k3, (HID_DIM, OUT_DIM), jnp.float32, -lim2, lim2)
    b2 = jax.random.uniform(k4, (1, OUT_DIM), jnp.float32, -lim2, lim2)
    return w1, b1, w2, b2


if __name__ == "__main__":
    key = jax.random.PRNGKey(0)
    kx, kp = jax.random.split(key)

    B = 8
    x = jax.random.normal(kx, (B, IN_DIM), jnp.float32)
    w1, b1, w2, b2 = init_params(kp)

    out = classification_model_forward(x, w1, b1, w2, b2)
    out = jax.block_until_ready(out)
    assert out.shape == (B, OUT_DIM)

    # Reference with matched precision (bf16 first matmul, f32 accumulate).
    xb = x.astype(jnp.bfloat16)
    w1b = w1.astype(jnp.bfloat16)
    h_ref = jnp.maximum(
        jnp.dot(xb, w1b, preferred_element_type=jnp.float32) + b1, 0.0)
    ref = jnp.dot(h_ref, w2, preferred_element_type=jnp.float32) + b2
    assert jnp.allclose(out, ref, atol=2e-3, rtol=2e-3), "mismatch vs bf16 reference"

    # Sanity check vs full-f32 reference (loose tolerance for bf16 weights/inputs).
    ref_f32 = jnp.maximum(x @ w1 + b1, 0.0) @ w2 + b2
    assert jnp.allclose(out, ref_f32, atol=5e-2, rtol=5e-2), "mismatch vs f32 reference"

    print("KERNEL_OK")
</pallas_src>

<mosaic_0001>
module attributes {stable_mosaic.version = 11 : i64} {
  func.func @_mlp_kernel(%arg0: i32, %arg1: memref<8x900xbf16, #tpu.memory_space<vmem>>, %arg2: memref<900x300xbf16, #tpu.memory_space<vmem>>, %arg3: memref<1x300xf32, #tpu.memory_space<vmem>>, %arg4: memref<300x128xf32, #tpu.memory_space<vmem>>, %arg5: memref<1x128xf32, #tpu.memory_space<vmem>>, %arg6: memref<8x128xf32, #tpu.memory_space<vmem>>) attributes {dimension_semantics = [#tpu.dimension_semantics<parallel>], iteration_bounds = array<i64: 1>, scalar_prefetch = 0 : i64, scratch_operands = 0 : i64, tpu.core_type = #tpu.core_type<tc>, window_params = [{transform_indices = @transform_0, window_bounds = array<i64: 8, 900>}, {pipeline_mode = #tpu.pipeline_mode<synchronous>, transform_indices = @transform_1, window_bounds = array<i64: 900, 300>}, {pipeline_mode = #tpu.pipeline_mode<synchronous>, transform_indices = @transform_2, window_bounds = array<i64: 1, 300>}, {pipeline_mode = #tpu.pipeline_mode<synchronous>, transform_indices = @transform_3, window_bounds = array<i64: 300, 128>}, {pipeline_mode = #tpu.pipeline_mode<synchronous>, transform_indices = @transform_4, window_bounds = array<i64: 1, 128>}, {transform_indices = @transform_5, window_bounds = array<i64: 8, 128>}]} {
    %c0 = arith.constant 0 : index
    %c0_0 = arith.constant 0 : index
    %0 = vector.load %arg1[%c0, %c0_0] : memref<8x900xbf16, #tpu.memory_space<vmem>>, vector<8x900xbf16>
    %c0_1 = arith.constant 0 : index
    %c0_2 = arith.constant 0 : index
    %1 = vector.load %arg2[%c0_1, %c0_2] : memref<900x300xbf16, #tpu.memory_space<vmem>>, vector<900x300xbf16>
    %cst = arith.constant dense<0.000000e+00> : vector<8x300xf32>
    %2 = tpu.matmul %0, %1, %cst {dimension_numbers = #tpu.dot_dimension_numbers<[1], [0], [0], [1], [0, 0, 1, 1], [], []>} : vector<8x900xbf16>, vector<900x300xbf16>, vector<8x300xf32> -> vector<8x300xf32>
    %c0_3 = arith.constant 0 : index
    %c0_4 = arith.constant 0 : index
    %3 = vector.load %arg3[%c0_3, %c0_4] : memref<1x300xf32, #tpu.memory_space<vmem>>, vector<1x300xf32>
    %4 = vector.broadcast %3 : vector<1x300xf32> to vector<8x300xf32>
    %5 = arith.addf %2, %4 : vector<8x300xf32>
    %cst_5 = arith.constant 0.000000e+00 : f32
    %6 = vector.broadcast %cst_5 : f32 to vector<8x300xf32>
    %7 = arith.maximumf %5, %6 : vector<8x300xf32>
    %c0_6 = arith.constant 0 : index
    %c0_7 = arith.constant 0 : index
    %8 = vector.load %arg4[%c0_6, %c0_7] : memref<300x128xf32, #tpu.memory_space<vmem>>, vector<300x128xf32>
    %cst_8 = arith.constant dense<0.000000e+00> : vector<8x128xf32>
    %9 = tpu.matmul %7, %8, %cst_8 {dimension_numbers = #tpu.dot_dimension_numbers<[1], [0], [0], [1], [0, 0, 1, 1], [], []>} : vector<8x300xf32>, vector<300x128xf32>, vector<8x128xf32> -> vector<8x128xf32>
    %c0_9 = arith.constant 0 : index
    %c0_10 = arith.constant 0 : index
    %10 = vector.load %arg5[%c0_9, %c0_10] : memref<1x128xf32, #tpu.memory_space<vmem>>, vector<1x128xf32>
    %11 = vector.broadcast %10 : vector<1x128xf32> to vector<8x128xf32>
    %12 = arith.addf %9, %11 : vector<8x128xf32>
    %c0_11 = arith.constant 0 : index
    %c0_12 = arith.constant 0 : index
    %13 = vector.load %arg6[%c0_11, %c0_12] : memref<8x128xf32, #tpu.memory_space<vmem>>, vector<8x128xf32>
    tpu.vector_store %arg6[%c0_11, %c0_12], %12 {strides = array<i32>} : memref<8x128xf32, #tpu.memory_space<vmem>>, vector<8x128xf32>,
    return
  }
  func.func @transform_0(%arg0: i32) -> (i32, i32) {
    %c0_i32 = arith.constant 0 : i32
    %c0_i32_0 = arith.constant 0 : i32
    return %arg0, %c0_i32 : i32, i32
  }
  func.func @transform_1(%arg0: i32) -> (i32, i32) {
    %c0_i32 = arith.constant 0 : i32
    %c0_i32_0 = arith.constant 0 : i32
    %c0_i32_1 = arith.constant 0 : i32
    return %c0_i32, %c0_i32_0 : i32, i32
  }
  func.func @transform_2(%arg0: i32) -> (i32, i32) {
    %c0_i32 = arith.constant 0 : i32
    %c0_i32_0 = arith.constant 0 : i32
    %c0_i32_1 = arith.constant 0 : i32
    return %c0_i32, %c0_i32_0 : i32, i32
  }
  func.func @transform_3(%arg0: i32) -> (i32, i32) {
    %c0_i32 = arith.constant 0 : i32
    %c0_i32_0 = arith.constant 0 : i32
    %c0_i32_1 = arith.constant 0 : i32
    return %c0_i32, %c0_i32_0 : i32, i32
  }
  func.func @transform_4(%arg0: i32) -> (i32, i32) {
    %c0_i32 = arith.constant 0 : i32
    %c0_i32_0 = arith.constant 0 : i32
    %c0_i32_1 = arith.constant 0 : i32
    return %c0_i32, %c0_i32_0 : i32, i32
  }
  func.func @transform_5(%arg0: i32) -> (i32, i32) {
    %c0_i32 = arith.constant 0 : i32
    %c0_i32_0 = arith.constant 0 : i32
    return %arg0, %c0_i32 : i32, i32
  }
}

</mosaic_0001>

<llo_original>
// kernel: classification_model_forward.1
$region0: #{classification_model_forward.1}
  #allocation0 [shape = 'u32[]', space=smem, size = 0x4, offset = 0x4, fixed_abs, tag = 'smem constant byte address 0x4 - core index']
  #allocation1 [shape = 'u32[144,128]{1,0:T(1,128)}', space=vmem, size = 0x12000, scoped, tag = 'internal scratch']
  %s0 = inlined_call_operand.vmem [shape: bf16[8,900], index: 0, kind: input, shape index: {}]
  %s1 = inlined_call_operand.vmem [shape: bf16[900,300], index: 1, kind: input, shape index: {}]
  %s2 = inlined_call_operand.vmem [shape: f32[1,300], index: 2, kind: input, shape index: {}]
  %s3 = inlined_call_operand.vmem [shape: f32[300,128], index: 3, kind: input, shape index: {}]
  %s4 = inlined_call_operand.vmem [shape: f32[1,128], index: 4, kind: input, shape index: {}]
  %s5 = inlined_call_operand.hbm [shape: f32[8,128], index: 5, kind: output, shape index: {}]
  %s6 = sld [smem:[#allocation0]]
  $region30: #{classification_model_forward.1} parent=0
    _
  %s8 = ssub.s32 1, %s6
  %s9 = scalar_select 0, %s8, %s6
  $region1: #{classification_model_forward.1} parent=0
    #allocation2 [shape = 'u8[4096]{0}', space=vmem, size = 0x1000, scoped, tag = 'output window, operand 0, single buffered']
    #allocation3 [shape = 's32[1]{0}', space=sflag, size = 0x4, scoped, tag = 'scoped memory for classification_model_forward.1']
    %10 = vsyncpa [#allocation3], 0
    // Predicated region
    $region2: #{classification_model_forward.1} parent=1 // pred_check
      _
    $region3: #{classification_model_forward.1} parent=1 // pred_check_branch
      %12 = sbr.rel (0) target = $region5
    $region4: #{classification_model_forward.1} parent=1 // pred_region
      _
    $region5: #{classification_model_forward.1} parent=1 // pred_fallthru
      _
    // Predicated region
    $region6: #{classification_model_forward.1} parent=1 // pred_check
      _
    $region7: #{classification_model_forward.1} parent=1 // pred_check_branch
      %14 = sbr.rel (0) target = $region9
    $region8: #{classification_model_forward.1} parent=1 // pred_region
      _
    $region9: #{classification_model_forward.1} parent=1 // pred_fallthru
      _
    // Predicated region
    $region10: #{classification_model_forward.1} parent=1 // pred_check
      _
    $region11: #{classification_model_forward.1} parent=1 // pred_check_branch
      %16 = sbr.rel (0) target = $region13
    $region12: #{classification_model_forward.1} parent=1 // pred_region
      _
    $region13: #{classification_model_forward.1} parent=1 // pred_fallthru
      _
    // Predicated region
    $region14: #{classification_model_forward.1} parent=1 // pred_check
      _
    $region15: #{classification_model_forward.1} parent=1 // pred_check_branch
      %18 = sbr.rel (0) target = $region17
    $region16: #{classification_model_forward.1} parent=1 // pred_region
      _
    $region17: #{classification_model_forward.1} parent=1 // pred_fallthru
      _
    // Predicated region
    $region18: #{classification_model_forward.1} parent=1 // pred_check
      _
    $region19: #{classification_model_forward.1} parent=1 // pred_check_branch
      %20 = sbr.rel (0) target = $region21
    $region20: #{classification_model_forward.1} parent=1 // pred_region
      _
    $region21: #{classification_model_forward.1} parent=1 // pred_fallthru
      _
    %v22 = vld [vmem:[%s0] sm:$0xff]
    %v23 = vld [vmem:[%s0 + $0x8] sm:$0xff]
    %v24 = vld [vmem:[%s0 + $0x10] sm:$0xff]
    %v25 = vld [vmem:[%s0 + $0x18] sm:$0xff]
    %v26 = vld [vmem:[%s1] sm:$0xff]
    %v27 = vld [vmem:[%s1 + $0x8] sm:$0xf]
    %v28 = vld [vmem:[%s1 + $0xc] sm:$0xff]
    %v29 = vld [vmem:[%s1 + $0x14] sm:$0xf]
    %v30 = vld [vmem:[%s1 + $0x18] sm:$0xff]
    %v31 = vld [vmem:[%s1 + $0x20] sm:$0xf]
    %v32 = vld [vmem:[%s1 + $0x24] sm:$0xff]
    %v33 = vld [vmem:[%s1 + $0x2c] sm:$0xf]
    %v34 = vld [vmem:[%s1 + $0x30] sm:$0xff]
    %v35 = vld [vmem:[%s1 + $0x38] sm:$0xf]
    %v36 = vld [vmem:[%s1 + $0x3c] sm:$0xff]
    %v37 = vld [vmem:[%s1 + $0x44] sm:$0xf]
    %v38 = vld [vmem:[%s1 + $0x48] sm:$0xff]
    %v39 = vld [vmem:[%s1 + $0x50] sm:$0xf]
    %v40 = vld [vmem:[%s1 + $0x54] sm:$0xff]
    %v41 = vld [vmem:[%s1 + $0x5c] sm:$0xf]
    %v42 = vld [vmem:[%s1 + $0x60] sm:$0xff]
    %v43 = vld [vmem:[%s1 + $0x68] sm:$0xf]
    %v44 = vld [vmem:[%s1 + $0x6c] sm:$0xff]
    %v45 = vld [vmem:[%s1 + $0x74] sm:$0xf]
    %v46 = vld [vmem:[%s1 + $0x78] sm:$0xff]
    %v47 = vld [vmem:[%s1 + $0x80] sm:$0xf]
    %v48 = vld [vmem:[%s1 + $0x84] sm:$0xff]
    %v49 = vld [vmem:[%s1 + $0x8c] sm:$0xf]
    %v50 = vld [vmem:[%s1 + $0x90] sm:$0xff]
    %v51 = vld [vmem:[%s1 + $0x98] sm:$0xf]
    %v52 = vld [vmem:[%s1 + $0x9c] sm:$0xff]
    %v53 = vld [vmem:[%s1 + $0xa4] sm:$0xf]
    %v54 = vld [vmem:[%s1 + $0xa8] sm:$0xff]
    %v55 = vld [vmem:[%s1 + $0xb0] sm:$0xf]
    %v56 = vld [vmem:[%s1 + $0xb4] sm:$0xff]
    %v57 = vld [vmem:[%s1 + $0xbc] sm:$0xf]
    %v58 = vld [vmem:[%s1 + $0xc0] sm:$0xff]
    %v59 = vld [vmem:[%s1 + $0xc8] sm:$0xf]
    %v60 = vld [vmem:[%s1 + $0xcc] sm:$0xff]
    %v61 = vld [vmem:[%s1 + $0xd4] sm:$0xf]
    %v62 = vld [vmem:[%s1 + $0xd8] sm:$0xff]
    %v63 = vld [vmem:[%s1 + $0xe0] sm:$0xf]
    %v64 = vld [vmem:[%s1 + $0xe4] sm:$0xff]
    %v65 = vld [vmem:[%s1 + $0xec] sm:$0xf]
    %v66 = vld [vmem:[%s1 + $0xf0] sm:$0xff]
    %v67 = vld [vmem:[%s1 + $0xf8] sm:$0xf]
    %v68 = vld [vmem:[%s1 + $0xfc] sm:$0xff]
    %v69 = vld [vmem:[%s1 + $0x104] sm:$0xf]
    %v70 = vld [vmem:[%s1 + $0x108] sm:$0xff]
    %v71 = vld [vmem:[%s1 + $0x110] sm:$0xf]
    %v72 = vld [vmem:[%s1 + $0x114] sm:$0xff]
    %v73 = vld [vmem:[%s1 + $0x11c] sm:$0xf]
    %v74 = vld [vmem:[%s1 + $0x120] sm:$0xff]
    %v75 = vld [vmem:[%s1 + $0x128] sm:$0xf]
    %v76 = vld [vmem:[%s1 + $0x12c] sm:$0xff]
    %v77 = vld [vmem:[%s1 + $0x134] sm:$0xf]
    %v78 = vld [vmem:[%s1 + $0x138] sm:$0xff]
    %v79 = vld [vmem:[%s1 + $0x140] sm:$0xf]
    %v80 = vld [vmem:[%s1 + $0x144] sm:$0xff]
    %v81 = vld [vmem:[%s1 + $0x14c] sm:$0xf]
    %v82 = vld [vmem:[%s1 + $0x150] sm:$0xff]
    %v83 = vld [vmem:[%s1 + $0x158] sm:$0xf]
    %v84 = vld [vmem:[%s1 + $0x15c] sm:$0xff]
    %v85 = vld [vmem:[%s1 + $0x164] sm:$0xf]
    %v86 = vld [vmem:[%s1 + $0x168] sm:$0xff]
    %v87 = vld [vmem:[%s1 + $0x170] sm:$0xf]
    %v88 = vld [vmem:[%s1 + $0x174] sm:$0xff]
    %v89 = vld [vmem:[%s1 + $0x17c] sm:$0xf]
    %v90 = vld [vmem:[%s1 + $0x180] sm:$0xff]
    %v91 = vld [vmem:[%s1 + $0x188] sm:$0xf]
    %v92 = vld [vmem:[%s1 + $0x18c] sm:$0xff]
    %v93 = vld [vmem:[%s1 + $0x194] sm:$0xf]
    %v94 = vld [vmem:[%s1 + $0x198] sm:$0xff]
    %v95 = vld [vmem:[%s1 + $0x1a0] sm:$0xf]
    %v96 = vld [vmem:[%s1 + $0x1a4] sm:$0xff]
    %v97 = vld [vmem:[%s1 + $0x1ac] sm:$0xf]
    %v98 = vld [vmem:[%s1 + $0x1b0] sm:$0xff]
    %v99 = vld [vmem:[%s1 + $0x1b8] sm:$0xf]
    %v100 = vld [vmem:[%s1 + $0x1bc] sm:$0xff]
    %v101 = vld [vmem:[%s1 + $0x1c4] sm:$0xf]
    %v102 = vld [vmem:[%s1 + $0x1c8] sm:$0xff]
    %v103 = vld [vmem:[%s1 + $0x1d0] sm:$0xf]
    %v104 = vld [vmem:[%s1 + $0x1d4] sm:$0xff]
    %v105 = vld [vmem:[%s1 + $0x1dc] sm:$0xf]
    %v106 = vld [vmem:[%s1 + $0x1e0] sm:$0xff]
    %v107 = vld [vmem:[%s1 + $0x1e8] sm:$0xf]
    %v108 = vld [vmem:[%s1 + $0x1ec] sm:$0xff]
    %v109 = vld [vmem:[%s1 + $0x1f4] sm:$0xf]
    %v110 = vld [vmem:[%s1 + $0x1f8] sm:$0xff]
    %v111 = vld [vmem:[%s1 + $0x200] sm:$0xf]
    %v112 = vld [vmem:[%s1 + $0x204] sm:$0xff]
    %v113 = vld [vmem:[%s1 + $0x20c] sm:$0xf]
    %v114 = vld [vmem:[%s1 + $0x210] sm:$0xff]
    %v115 = vld [vmem:[%s1 + $0x218] sm:$0xf]
    %v116 = vld [vmem:[%s1 + $0x21c] sm:$0xff]
    %v117 = vld [vmem:[%s1 + $0x224] sm:$0xf]
    %v118 = vld [vmem:[%s1 + $0x228] sm:$0xff]
    %v119 = vld [vmem:[%s1 + $0x230] sm:$0xf]
    %v120 = vld [vmem:[%s1 + $0x234] sm:$0xff]
    %v121 = vld [vmem:[%s1 + $0x23c] sm:$0xf]
    %v122 = vld [vmem:[%s1 + $0x240] sm:$0xff]
    %v123 = vld [vmem:[%s1 + $0x248] sm:$0xf]
    %v124 = vld [vmem:[%s1 + $0x24c] sm:$0xff]
    %v125 = vld [vmem:[%s1 + $0x254] sm:$0xf]
    %v126 = vld [vmem:[%s1 + $0x258] sm:$0xff]
    %v127 = vld [vmem:[%s1 + $0x260] sm:$0xf]
    %v128 = vld [vmem:[%s1 + $0x264] sm:$0xff]
    %v129 = vld [vmem:[%s1 + $0x26c] sm:$0xf]
    %v130 = vld [vmem:[%s1 + $0x270] sm:$0xff]
    %v131 = vld [vmem:[%s1 + $0x278] sm:$0xf]
    %v132 = vld [vmem:[%s1 + $0x27c] sm:$0xff]
    %v133 = vld [vmem:[%s1 + $0x284] sm:$0xf]
    %v134 = vld [vmem:[%s1 + $0x288] sm:$0xff]
    %v135 = vld [vmem:[%s1 + $0x290] sm:$0xf]
    %v136 = vld [vmem:[%s1 + $0x294] sm:$0xff]
    %v137 = vld [vmem:[%s1 + $0x29c] sm:$0xf]
    %v138 = vld [vmem:[%s1 + $0x2a0] sm:$0xff]
    %v139 = vld [vmem:[%s1 + $0x2a8] sm:$0xf]
    %v140 = vld [vmem:[%s1 + $0x2ac] sm:$0xff]
    %v141 = vld [vmem:[%s1 + $0x2b4] sm:$0xf]
    %v142 = vld [vmem:[%s1 + $0x2b8] sm:$0xff]
    %v143 = vld [vmem:[%s1 + $0x2c0] sm:$0xf]
    %v144 = vld [vmem:[%s1 + $0x2c4] sm:$0xff]
    %v145 = vld [vmem:[%s1 + $0x2cc] sm:$0xf]
    %v146 = vld [vmem:[%s1 + $0x2d0] sm:$0xff]
    %v147 = vld [vmem:[%s1 + $0x2d8] sm:$0xf]
    %v148 = vld [vmem:[%s1 + $0x2dc] sm:$0xff]
    %v149 = vld [vmem:[%s1 + $0x2e4] sm:$0xf]
    %v150 = vld [vmem:[%s1 + $0x2e8] sm:$0xff]
    %v151 = vld [vmem:[%s1 + $0x2f0] sm:$0xf]
    %v152 = vld [vmem:[%s1 + $0x2f4] sm:$0xff]
    %v153 = vld [vmem:[%s1 + $0x2fc] sm:$0xf]
    %v154 = vld [vmem:[%s1 + $0x300] sm:$0xff]
    %v155 = vld [vmem:[%s1 + $0x308] sm:$0xf]
    %v156 = vld [vmem:[%s1 + $0x30c] sm:$0xff]
    %v157 = vld [vmem:[%s1 + $0x314] sm:$0xf]
    %v158 = vld [vmem:[%s1 + $0x318] sm:$0xff]
    %v159 = vld [vmem:[%s1 + $0x320] sm:$0xf]
    %v160 = vld [vmem:[%s1 + $0x324] sm:$0xff]
    %v161 = vld [vmem:[%s1 + $0x32c] sm:$0xf]
    %v162 = vld [vmem:[%s1 + $0x330] sm:$0xff]
    %v163 = vld [vmem:[%s1 + $0x338] sm:$0xf]
    %v164 = vld [vmem:[%s1 + $0x33c] sm:$0xff]
    %v165 = vld [vmem:[%s1 + $0x344] sm:$0xf]
    %v166 = vld [vmem:[%s1 + $0x348] sm:$0xff]
    %v167 = vld [vmem:[%s1 + $0x350] sm:$0xf]
    %v168 = vld [vmem:[%s1 + $0x354] sm:$0xff]
    %v169 = vld [vmem:[%s1 + $0x35c] sm:$0xf]
    %v170 = vld [vmem:[%s1 + $0x360] sm:$0xff]
    %v171 = vld [vmem:[%s1 + $0x368] sm:$0xf]
    %v172 = vld [vmem:[%s1 + $0x36c] sm:$0xff]
    %v173 = vld [vmem:[%s1 + $0x374] sm:$0xf]
    %v174 = vld [vmem:[%s1 + $0x378] sm:$0xff]
    %v175 = vld [vmem:[%s1 + $0x380] sm:$0xf]
    %v176 = vld [vmem:[%s1 + $0x384] sm:$0xff]
    %v177 = vld [vmem:[%s1 + $0x38c] sm:$0xf]
    %v178 = vld [vmem:[%s1 + $0x390] sm:$0xff]
    %v179 = vld [vmem:[%s1 + $0x398] sm:$0xf]
    %v180 = vld [vmem:[%s1 + $0x39c] sm:$0xff]
    %v181 = vld [vmem:[%s1 + $0x3a4] sm:$0xf]
    %v182 = vld [vmem:[%s1 + $0x3a8] sm:$0xff]
    %v183 = vld [vmem:[%s1 + $0x3b0] sm:$0xf]
    %v184 = vld [vmem:[%s1 + $0x3b4] sm:$0xff]
    %v185 = vld [vmem:[%s1 + $0x3bc] sm:$0xf]
    %v186 = vld [vmem:[%s1 + $0x3c0] sm:$0xff]
    %v187 = vld [vmem:[%s1 + $0x3c8] sm:$0xf]
    %v188 = vld [vmem:[%s1 + $0x3cc] sm:$0xff]
    %v189 = vld [vmem:[%s1 + $0x3d4] sm:$0xf]
    %v190 = vld [vmem:[%s1 + $0x3d8] sm:$0xff]
    %v191 = vld [vmem:[%s1 + $0x3e0] sm:$0xf]
    %v192 = vld [vmem:[%s1 + $0x3e4] sm:$0xff]
    %v193 = vld [vmem:[%s1 + $0x3ec] sm:$0xf]
    %v194 = vld [vmem:[%s1 + $0x3f0] sm:$0xff]
    %v195 = vld [vmem:[%s1 + $0x3f8] sm:$0xf]
    %v196 = vld [vmem:[%s1 + $0x3fc] sm:$0xff]
    %v197 = vld [vmem:[%s1 + $0x404] sm:$0xf]
    %v198 = vld [vmem:[%s1 + $0x408] sm:$0xff]
    %v199 = vld [vmem:[%s1 + $0x410] sm:$0xf]
    %v200 = vld [vmem:[%s1 + $0x414] sm:$0xff]
    %v201 = vld [vmem:[%s1 + $0x41c] sm:$0xf]
    %v202 = vld [vmem:[%s1 + $0x420] sm:$0xff]
    %v203 = vld [vmem:[%s1 + $0x428] sm:$0xf]
    %v204 = vld [vmem:[%s1 + $0x42c] sm:$0xff]
    %v205 = vld [vmem:[%s1 + $0x434] sm:$0xf]
    %v206 = vld [vmem:[%s1 + $0x438] sm:$0xff]
    %v207 = vld [vmem:[%s1 + $0x440] sm:$0xf]
    %v208 = vld [vmem:[%s1 + $0x444] sm:$0xff]
    %v209 = vld [vmem:[%s1 + $0x44c] sm:$0xf]
    %v210 = vld [vmem:[%s1 + $0x450] sm:$0xff]
    %v211 = vld [vmem:[%s1 + $0x458] sm:$0xf]
    %v212 = vld [vmem:[%s1 + $0x45c] sm:$0xff]
    %v213 = vld [vmem:[%s1 + $0x464] sm:$0xf]
    %v214 = vld [vmem:[%s1 + $0x468] sm:$0xff]
    %v215 = vld [vmem:[%s1 + $0x470] sm:$0xf]
    %v216 = vld [vmem:[%s1 + $0x474] sm:$0xff]
    %v217 = vld [vmem:[%s1 + $0x47c] sm:$0xf]
    %v218 = vld [vmem:[%s1 + $0x480] sm:$0xff]
    %v219 = vld [vmem:[%s1 + $0x488] sm:$0xf]
    %v220 = vld [vmem:[%s1 + $0x48c] sm:$0xff]
    %v221 = vld [vmem:[%s1 + $0x494] sm:$0xf]
    %v222 = vld [vmem:[%s1 + $0x498] sm:$0xff]
    %v223 = vld [vmem:[%s1 + $0x4a0] sm:$0xf]
    %v224 = vld [vmem:[%s1 + $0x4a4] sm:$0xff]
    %v225 = vld [vmem:[%s1 + $0x4ac] sm:$0xf]
    %v226 = vld [vmem:[%s1 + $0x4b0] sm:$0xff]
    %v227 = vld [vmem:[%s1 + $0x4b8] sm:$0xf]
    %v228 = vld [vmem:[%s1 + $0x4bc] sm:$0xff]
    %v229 = vld [vmem:[%s1 + $0x4c4] sm:$0xf]
    %v230 = vld [vmem:[%s1 + $0x4c8] sm:$0xff]
    %v231 = vld [vmem:[%s1 + $0x4d0] sm:$0xf]
    %v232 = vld [vmem:[%s1 + $0x4d4] sm:$0xff]
    %v233 = vld [vmem:[%s1 + $0x4dc] sm:$0xf]
    %v234 = vld [vmem:[%s1 + $0x4e0] sm:$0xff]
    %v235 = vld [vmem:[%s1 + $0x4e8] sm:$0xf]
    %v236 = vld [vmem:[%s1 + $0x4ec] sm:$0xff]
    %v237 = vld [vmem:[%s1 + $0x4f4] sm:$0xf]
    %v238 = vld [vmem:[%s1 + $0x4f8] sm:$0xff]
    %v239 = vld [vmem:[%s1 + $0x500] sm:$0xf]
    %v240 = vld [vmem:[%s1 + $0x504] sm:$0xff]
    %v241 = vld [vmem:[%s1 + $0x50c] sm:$0xf]
    %v242 = vld [vmem:[%s1 + $0x510] sm:$0xff]
    %v243 = vld [vmem:[%s1 + $0x518] sm:$0xf]
    %v244 = vld [vmem:[%s1 + $0x51c] sm:$0xff]
    %v245 = vld [vmem:[%s1 + $0x524] sm:$0xf]
    %v246 = vld [vmem:[%s1 + $0x528] sm:$0xff]
    %v247 = vld [vmem:[%s1 + $0x530] sm:$0xf]
    %v248 = vld [vmem:[%s1 + $0x534] sm:$0xff]
    %v249 = vld [vmem:[%s1 + $0x53c] sm:$0xf]
    %v250 = vld [vmem:[%s1 + $0x540] sm:$0x33]
    %v251 = vld [vmem:[%s1 + $0x548] sm:$0x3]
    %v252 = vld [vmem:[%s2] sm:$0x7]
    %v254 = vlaneseq
    %v255 = vshrl.u32 %v254, 7
    %v256 = vsub.s32 0, %v255
    %v257 = vrot.slane %v252, %v256
    %v258 = vlaneseq
    %v259 = vshrl.u32 %v258, 7
    %v260 = vsub.s32 1, %v259
    %v261 = vrot.slane %v252, %v260
    %v262 = vlaneseq
    %v263 = vshrl.u32 %v262, 7
    %v264 = vsub.s32 2, %v263
    %v265 = vrot.slane %v252, %v264
    %v273 = vunpack.c.l.b16 %v22
    %v274 = vunpack.c.h.b16 %v22
    %v275 = vunpack.c.l.b16 %v23
    %v276 = vunpack.c.h.b16 %v23
    %v277 = vunpack.c.l.b16 %v24
    %v278 = vunpack.c.h.b16 %v24
    %v279 = vunpack.c.l.b16 %v25
    %v280 = vunpack.c.h.b16 %v25
    %v281 = vpack.c.b16 %v273, %v273
    %v282 = vpack.c.b16 %v274, %v274
    %v283 = vpack.c.b16 %v275, %v275
    %v284 = vpack.c.b16 %v276, %v276
    %v285 = vpack.c.b16 %v277, %v277
    %v286 = vpack.c.b16 %v278, %v278
    %v287 = vpack.c.b16 %v279, %v279
    %v288 = vpack.c.b16 %v280, %v280
    %v522 = vunpack.c.l.b16 %v26
    %v523 = vunpack.c.h.b16 %v26
    %v524 = vunpack.c.l.b16 %v27
    %v525 = vunpack.c.l.b16 %v28
    %v526 = vunpack.c.h.b16 %v28
    %v527 = vunpack.c.l.b16 %v29
    %v528 = vunpack.c.l.b16 %v30
    %v529 = vunpack.c.h.b16 %v30
    %v530 = vunpack.c.l.b16 %v31
    %v531 = vunpack.c.l.b16 %v32
    %v532 = vunpack.c.h.b16 %v32
    %v533 = vunpack.c.l.b16 %v33
    %v534 = vunpack.c.l.b16 %v34
    %v535 = vunpack.c.h.b16 %v34
    %v536 = vunpack.c.l.b16 %v35
    %v537 = vunpack.c.l.b16 %v36
    %v538 = vunpack.c.h.b16 %v36
    %v539 = vunpack.c.l.b16 %v37
    %v540 = vunpack.c.l.b16 %v38
    %v541 = vunpack.c.h.b16 %v38
    %v542 = vunpack.c.l.b16 %v39
    %v543 = vunpack.c.l.b16 %v40
    %v544 = vunpack.c.h.b16 %v40
    %v545 = vunpack.c.l.b16 %v41
    %v546 = vunpack.c.l.b16 %v42
    %v547 = vunpack.c.h.b16 %v42
    %v548 = vunpack.c.l.b16 %v43
    %v549 = vunpack.c.l.b16 %v44
    %v550 = vunpack.c.h.b16 %v44
    %v551 = vunpack.c.l.b16 %v45
    %v552 = vunpack.c.l.b16 %v46
    %v553 = vunpack.c.h.b16 %v46
    %v554 = vunpack.c.l.b16 %v47
    %v555 = vunpack.c.l.b16 %v48
    %v556 = vunpack.c.h.b16 %v48
    %v557 = vunpack.c.l.b16 %v49
    %v558 = vunpack.c.l.b16 %v50
    %v559 = vunpack.c.h.b16 %v50
    %v560 = vunpack.c.l.b16 %v51
    %v561 = vunpack.c.l.b16 %v52
    %v562 = vunpack.c.h.b16 %v52
    %v563 = vunpack.c.l.b16 %v53
    %v564 = vunpack.c.l.b16 %v54
    %v565 = vunpack.c.h.b16 %v54
    %v566 = vunpack.c.l.b16 %v55
    %v567 = vunpack.c.l.b16 %v56
    %v568 = vunpack.c.h.b16 %v56
    %v569 = vunpack.c.l.b16 %v57
    %v570 = vunpack.c.l.b16 %v58
    %v571 = vunpack.c.h.b16 %v58
    %v572 = vunpack.c.l.b16 %v59
    %v573 = vunpack.c.l.b16 %v60
    %v574 = vunpack.c.h.b16 %v60
    %v575 = vunpack.c.l.b16 %v61
    %v576 = vunpack.c.l.b16 %v62
    %v577 = vunpack.c.h.b16 %v62
    %v578 = vunpack.c.l.b16 %v63
    %v579 = vunpack.c.l.b16 %v64
    %v580 = vunpack.c.h.b16 %v64
    %v581 = vunpack.c.l.b16 %v65
    %v582 = vunpack.c.l.b16 %v66
    %v583 = vunpack.c.h.b16 %v66
    %v584 = vunpack.c.l.b16 %v67
    %v585 = vunpack.c.l.b16 %v68
    %v586 = vunpack.c.h.b16 %v68
    %v587 = vunpack.c.l.b16 %v69
    %v588 = vunpack.c.l.b16 %v70
    %v589 = vunpack.c.h.b16 %v70
    %v590 = vunpack.c.l.b16 %v71
    %v591 = vunpack.c.l.b16 %v72
    %v592 = vunpack.c.h.b16 %v72
    %v593 = vunpack.c.l.b16 %v73
    %v594 = vunpack.c.l.b16 %v74
    %v595 = vunpack.c.h.b16 %v74
    %v596 = vunpack.c.l.b16 %v75
    %v597 = vunpack.c.l.b16 %v76
    %v598 = vunpack.c.h.b16 %v76
    %v599 = vunpack.c.l.b16 %v77
    %v600 = vunpack.c.l.b16 %v78
    %v601 = vunpack.c.h.b16 %v78
    %v602 = vunpack.c.l.b16 %v79
    %v603 = vunpack.c.l.b16 %v80
    %v604 = vunpack.c.h.b16 %v80
    %v605 = vunpack.c.l.b16 %v81
    %v606 = vunpack.c.l.b16 %v82
    %v607 = vunpack.c.h.b16 %v82
    %v608 = vunpack.c.l.b16 %v83
    %v609 = vunpack.c.l.b16 %v84
    %v610 = vunpack.c.h.b16 %v84
    %v611 = vunpack.c.l.b16 %v85
    %v612 = vunpack.c.l.b16 %v86
    %v613 = vunpack.c.h.b16 %v86
    %v614 = vunpack.c.l.b16 %v87
    %v615 = vunpack.c.l.b16 %v88
    %v616 = vunpack.c.h.b16 %v88
    %v617 = vunpack.c.l.b16 %v89
    %v618 = vunpack.c.l.b16 %v90
    %v619 = vunpack.c.h.b16 %v90
    %v620 = vunpack.c.l.b16 %v91
    %v621 = vunpack.c.l.b16 %v92
    %v622 = vunpack.c.h.b16 %v92
    %v623 = vunpack.c.l.b16 %v93
    %v624 = vunpack.c.l.b16 %v94
    %v625 = vunpack.c.h.b16 %v94
    %v626 = vunpack.c.l.b16 %v95
    %v627 = vunpack.c.l.b16 %v96
    %v628 = vunpack.c.h.b16 %v96
    %v629 = vunpack.c.l.b16 %v97
    %v630 = vunpack.c.l.b16 %v98
    %v631 = vunpack.c.h.b16 %v98
    %v632 = vunpack.c.l.b16 %v99
    %v633 = vunpack.c.l.b16 %v100
    %v634 = vunpack.c.h.b16 %v100
    %v635 = vunpack.c.l.b16 %v101
    %v636 = vunpack.c.l.b16 %v102
    %v637 = vunpack.c.h.b16 %v102
    %v638 = vunpack.c.l.b16 %v103
    %v639 = vunpack.c.l.b16 %v104
    %v640 = vunpack.c.h.b16 %v104
    %v641 = vunpack.c.l.b16 %v105
    %v642 = vunpack.c.l.b16 %v106
    %v643 = vunpack.c.h.b16 %v106
    %v644 = vunpack.c.l.b16 %v107
    %v645 = vunpack.c.l.b16 %v108
    %v646 = vunpack.c.h.b16 %v108
    %v647 = vunpack.c.l.b16 %v109
    %v648 = vunpack.c.l.b16 %v110
    %v649 = vunpack.c.h.b16 %v110
    %v650 = vunpack.c.l.b16 %v111
    %v651 = vunpack.c.l.b16 %v112
    %v652 = vunpack.c.h.b16 %v112
    %v653 = vunpack.c.l.b16 %v113
    %v654 = vunpack.c.l.b16 %v114
    %v655 = vunpack.c.h.b16 %v114
    %v656 = vunpack.c.l.b16 %v115
    %v657 = vunpack.c.l.b16 %v116
    %v658 = vunpack.c.h.b16 %v116
    %v659 = vunpack.c.l.b16 %v117
    %v660 = vunpack.c.l.b16 %v118
    %v661 = vunpack.c.h.b16 %v118
    %v662 = vunpack.c.l.b16 %v119
    %v663 = vunpack.c.l.b16 %v120
    %v664 = vunpack.c.h.b16 %v120
    %v665 = vunpack.c.l.b16 %v121
    %v666 = vunpack.c.l.b16 %v122
    %v667 = vunpack.c.h.b16 %v122
    %v668 = vunpack.c.l.b16 %v123
    %v669 = vunpack.c.l.b16 %v124
    %v670 = vunpack.c.h.b16 %v124
    %v671 = vunpack.c.l.b16 %v125
    %v672 = vunpack.c.l.b16 %v126
    %v673 = vunpack.c.h.b16 %v126
    %v674 = vunpack.c.l.b16 %v127
    %v675 = vunpack.c.l.b16 %v128
    %v676 = vunpack.c.h.b16 %v128
    %v677 = vunpack.c.l.b16 %v129
    %v678 = vunpack.c.l.b16 %v130
    %v679 = vunpack.c.h.b16 %v130
    %v680 = vunpack.c.l.b16 %v131
    %v681 = vunpack.c.l.b16 %v132
    %v682 = vunpack.c.h.b16 %v132
    %v683 = vunpack.c.l.b16 %v133
    %v684 = vunpack.c.l.b16 %v134
    %v685 = vunpack.c.h.b16 %v134
    %v686 = vunpack.c.l.b16 %v135
    %v687 = vunpack.c.l.b16 %v136
    %v688 = vunpack.c.h.b16 %v136
    %v689 = vunpack.c.l.b16 %v137
    %v690 = vunpack.c.l.b16 %v138
    %v691 = vunpack.c.h.b16 %v138
    %v692 = vunpack.c.l.b16 %v139
    %v693 = vunpack.c.l.b16 %v140
    %v694 = vunpack.c.h.b16 %v140
    %v695 = vunpack.c.l.b16 %v141
    %v696 = vunpack.c.l.b16 %v142
    %v697 = vunpack.c.h.b16 %v142
    %v698 = vunpack.c.l.b16 %v143
    %v699 = vunpack.c.l.b16 %v144
    %v700 = vunpack.c.h.b16 %v144
    %v701 = vunpack.c.l.b16 %v145
    %v702 = vunpack.c.l.b16 %v146
    %v703 = vunpack.c.h.b16 %v146
    %v704 = vunpack.c.l.b16 %v147
    %v705 = vunpack.c.l.b16 %v148
    %v706 = vunpack.c.h.b16 %v148
    %v707 = vunpack.c.l.b16 %v149
    %v708 = vunpack.c.l.b16 %v150
    %v709 = vunpack.c.h.b16 %v150
    %v710 = vunpack.c.l.b16 %v151
    %v711 = vunpack.c.l.b16 %v152
    %v712 = vunpack.c.h.b16 %v152
    %v713 = vunpack.c.l.b16 %v153
    %v714 = vunpack.c.l.b16 %v154
    %v715 = vunpack.c.h.b16 %v154
    %v716 = vunpack.c.l.b16 %v155
    %v717 = vunpack.c.l.b16 %v156
    %v718 = vunpack.c.h.b16 %v156
    %v719 = vunpack.c.l.b16 %v157
    %v720 = vunpack.c.l.b16 %v158
    %v721 = vunpack.c.h.b16 %v158
    %v722 = vunpack.c.l.b16 %v159
    %v723 = vunpack.c.l.b16 %v160
    %v724 = vunpack.c.h.b16 %v160
    %v725 = vunpack.c.l.b16 %v161
    %v726 = vunpack.c.l.b16 %v162
    %v727 = vunpack.c.h.b16 %v162
    %v728 = vunpack.c.l.b16 %v163
    %v729 = vunpack.c.l.b16 %v164
    %v730 = vunpack.c.h.b16 %v164
    %v731 = vunpack.c.l.b16 %v165
    %v732 = vunpack.c.l.b16 %v166
    %v733 = vunpack.c.h.b16 %v166
    %v734 = vunpack.c.l.b16 %v167
    %v735 = vunpack.c.l.b16 %v168
    %v736 = vunpack.c.h.b16 %v168
    %v737 = vunpack.c.l.b16 %v169
    %v738 = vunpack.c.l.b16 %v170
    %v739 = vunpack.c.h.b16 %v170
    %v740 = vunpack.c.l.b16 %v171
    %v741 = vunpack.c.l.b16 %v172
    %v742 = vunpack.c.h.b16 %v172
    %v743 = vunpack.c.l.b16 %v173
    %v744 = vunpack.c.l.b16 %v174
    %v745 = vunpack.c.h.b16 %v174
    %v746 = vunpack.c.l.b16 %v175
    %v747 = vunpack.c.l.b16 %v176
    %v748 = vunpack.c.h.b16 %v176
    %v749 = vunpack.c.l.b16 %v177
    %v750 = vunpack.c.l.b16 %v178
    %v751 = vunpack.c.h.b16 %v178
    %v752 = vunpack.c.l.b16 %v179
    %v753 = vunpack.c.l.b16 %v180
    %v754 = vunpack.c.h.b16 %v180
    %v755 = vunpack.c.l.b16 %v181
    %v756 = vunpack.c.l.b16 %v182
    %v757 = vunpack.c.h.b16 %v182
    %v758 = vunpack.c.l.b16 %v183
    %v759 = vunpack.c.l.b16 %v184
    %v760 = vunpack.c.h.b16 %v184
    %v761 = vunpack.c.l.b16 %v185
    %v762 = vunpack.c.l.b16 %v186
    %v763 = vunpack.c.h.b16 %v186
    %v764 = vunpack.c.l.b16 %v187
    %v765 = vunpack.c.l.b16 %v188
    %v766 = vunpack.c.h.b16 %v188
    %v767 = vunpack.c.l.b16 %v189
    %v768 = vunpack.c.l.b16 %v190
    %v769 = vunpack.c.h.b16 %v190
    %v770 = vunpack.c.l.b16 %v191
    %v771 = vunpack.c.l.b16 %v192
    %v772 = vunpack.c.h.b16 %v192
    %v773 = vunpack.c.l.b16 %v193
    %v774 = vunpack.c.l.b16 %v194
    %v775 = vunpack.c.h.b16 %v194
    %v776 = vunpack.c.l.b16 %v195
    %v777 = vunpack.c.l.b16 %v196
    %v778 = vunpack.c.h.b16 %v196
    %v779 = vunpack.c.l.b16 %v197
    %v780 = vunpack.c.l.b16 %v198
    %v781 = vunpack.c.h.b16 %v198
    %v782 = vunpack.c.l.b16 %v199
    %v783 = vunpack.c.l.b16 %v200
    %v784 = vunpack.c.h.b16 %v200
    %v785 = vunpack.c.l.b16 %v201
    %v786 = vunpack.c.l.b16 %v202
    %v787 = vunpack.c.h.b16 %v202
    %v788 = vunpack.c.l.b16 %v203
    %v789 = vunpack.c.l.b16 %v204
    %v790 = vunpack.c.h.b16 %v204
    %v791 = vunpack.c.l.b16 %v205
    %v792 = vunpack.c.l.b16 %v206
    %v793 = vunpack.c.h.b16 %v206
    %v794 = vunpack.c.l.b16 %v207
    %v795 = vunpack.c.l.b16 %v208
    %v796 = vunpack.c.h.b16 %v208
    %v797 = vunpack.c.l.b16 %v209
    %v798 = vunpack.c.l.b16 %v210
    %v799 = vunpack.c.h.b16 %v210
    %v800 = vunpack.c.l.b16 %v211
    %v801 = vunpack.c.l.b16 %v212
    %v802 = vunpack.c.h.b16 %v212
    %v803 = vunpack.c.l.b16 %v213
    %v804 = vunpack.c.l.b16 %v214
    %v805 = vunpack.c.h.b16 %v214
    %v806 = vunpack.c.l.b16 %v215
    %v807 = vunpack.c.l.b16 %v216
    %v808 = vunpack.c.h.b16 %v216
    %v809 = vunpack.c.l.b16 %v217
    %v810 = vunpack.c.l.b16 %v218
    %v811 = vunpack.c.h.b16 %v218
    %v812 = vunpack.c.l.b16 %v219
    %v813 = vunpack.c.l.b16 %v220
    %v814 = vunpack.c.h.b16 %v220
    %v815 = vunpack.c.l.b16 %v221
    %v816 = vunpack.c.l.b16 %v222
    %v817 = vunpack.c.h.b16 %v222
    %v818 = vunpack.c.l.b16 %v223
    %v819 = vunpack.c.l.b16 %v224
    %v820 = vunpack.c.h.b16 %v224
    %v821 = vunpack.c.l.b16 %v225
    %v822 = vunpack.c.l.b16 %v226
    %v823 = vunpack.c.h.b16 %v226
    %v824 = vunpack.c.l.b16 %v227
    %v825 = vunpack.c.l.b16 %v228
    %v826 = vunpack.c.h.b16 %v228
    %v827 = vunpack.c.l.b16 %v229
    %v828 = vunpack.c.l.b16 %v230
    %v829 = vunpack.c.h.b16 %v230
    %v830 = vunpack.c.l.b16 %v231
    %v831 = vunpack.c.l.b16 %v232
    %v832 = vunpack.c.h.b16 %v232
    %v833 = vunpack.c.l.b16 %v233
    %v834 = vunpack.c.l.b16 %v234
    %v835 = vunpack.c.h.b16 %v234
    %v836 = vunpack.c.l.b16 %v235
    %v837 = vunpack.c.l.b16 %v236
    %v838 = vunpack.c.h.b16 %v236
    %v839 = vunpack.c.l.b16 %v237
    %v840 = vunpack.c.l.b16 %v238
    %v841 = vunpack.c.h.b16 %v238
    %v842 = vunpack.c.l.b16 %v239
    %v843 = vunpack.c.l.b16 %v240
    %v844 = vunpack.c.h.b16 %v240
    %v845 = vunpack.c.l.b16 %v241
    %v846 = vunpack.c.l.b16 %v242
    %v847 = vunpack.c.h.b16 %v242
    %v848 = vunpack.c.l.b16 %v243
    %v849 = vunpack.c.l.b16 %v244
    %v850 = vunpack.c.h.b16 %v244
    %v851 = vunpack.c.l.b16 %v245
    %v852 = vunpack.c.l.b16 %v246
    %v853 = vunpack.c.h.b16 %v246
    %v854 = vunpack.c.l.b16 %v247
    %v855 = vunpack.c.l.b16 %v248
    %v856 = vunpack.c.h.b16 %v248
    %v857 = vunpack.c.l.b16 %v249
    %v858 = vunpack.c.l.b16 %v250
    %v859 = vunpack.c.h.b16 %v250
    %v860 = vunpack.c.l.b16 %v251
    %v861 = vpack.c.b16 %v525, %v522
    %v862 = vpack.c.b16 %v526, %v523
    %v863 = vpack.c.b16 %v527, %v524
    %v864 = vpack.c.b16 %v531, %v528
    %v865 = vpack.c.b16 %v532, %v529
    %v866 = vpack.c.b16 %v533, %v530
    %v867 = vpack.c.b16 %v537, %v534
    %v868 = vpack.c.b16 %v538, %v535
    %v869 = vpack.c.b16 %v539, %v536
    %v870 = vpack.c.b16 %v543, %v540
    %v871 = vpack.c.b16 %v544, %v541
    %v872 = vpack.c.b16 %v545, %v542
    %v873 = vpack.c.b16 %v549, %v546
    %v874 = vpack.c.b16 %v550, %v547
    %v875 = vpack.c.b16 %v551, %v548
    %v876 = vpack.c.b16 %v555, %v552
    %v877 = vpack.c.b16 %v556, %v553
    %v878 = vpack.c.b16 %v557, %v554
    %v879 = vpack.c.b16 %v561, %v558
    %v880 = vpack.c.b16 %v562, %v559
    %v881 = vpack.c.b16 %v563, %v560
    %v882 = vpack.c.b16 %v567, %v564
    %v883 = vpack.c.b16 %v568, %v565
    %v884 = vpack.c.b16 %v569, %v566
    %v885 = vpack.c.b16 %v573, %v570
    %v886 = vpack.c.b16 %v574, %v571
    %v887 = vpack.c.b16 %v575, %v572
    %v888 = vpack.c.b16 %v579, %v576
    %v889 = vpack.c.b16 %v580, %v577
    %v890 = vpack.c.b16 %v581, %v578
    %v891 = vpack.c.b16 %v585, %v582
    %v892 = vpack.c.b16 %v586, %v583
    %v893 = vpack.c.b16 %v587, %v584
    %v894 = vpack.c.b16 %v591, %v588
    %v895 = vpack.c.b16 %v592, %v589
    %v896 = vpack.c.b16 %v593, %v590
    %v897 = vpack.c.b16 %v597, %v594
    %v898 = vpack.c.b16 %v598, %v595
    %v899 = vpack.c.b16 %v599, %v596
    %v900 = vpack.c.b16 %v603, %v600
    %v901 = vpack.c.b16 %v604, %v601
    %v902 = vpack.c.b16 %v605, %v602
    %v903 = vpack.c.b16 %v609, %v606
    %v904 = vpack.c.b16 %v610, %v607
    %v905 = vpack.c.b16 %v611, %v608
    %v906 = vpack.c.b16 %v615, %v612
    %v907 = vpack.c.b16 %v616, %v613
    %v908 = vpack.c.b16 %v617, %v614
    %v909 = vpack.c.b16 %v621, %v618
    %v910 = vpack.c.b16 %v622, %v619
    %v911 = vpack.c.b16 %v623, %v620
    %v912 = vpack.c.b16 %v627, %v624
    %v913 = vpack.c.b16 %v628, %v625
    %v914 = vpack.c.b16 %v629, %v626
    %v915 = vpack.c.b16 %v633, %v630
    %v916 = vpack.c.b16 %v634, %v631
    %v917 = vpack.c.b16 %v635, %v632
    %v918 = vpack.c.b16 %v639, %v636
    %v919 = vpack.c.b16 %v640, %v637
    %v920 = vpack.c.b16 %v641, %v638
    %v921 = vpack.c.b16 %v645, %v642
    %v922 = vpack.c.b16 %v646, %v643
    %v923 = vpack.c.b16 %v647, %v644
    %v924 = vpack.c.b16 %v651, %v648
    %v925 = vpack.c.b16 %v652, %v649
    %v926 = vpack.c.b16 %v653, %v650
    %v927 = vpack.c.b16 %v657, %v654
    %v928 = vpack.c.b16 %v658, %v655
    %v929 = vpack.c.b16 %v659, %v656
    %v930 = vpack.c.b16 %v663, %v660
    %v931 = vpack.c.b16 %v664, %v661
    %v932 = vpack.c.b16 %v665, %v662
    %v933 = vpack.c.b16 %v669, %v666
    %v934 = vpack.c.b16 %v670, %v667
    %v935 = vpack.c.b16 %v671, %v668
    %v936 = vpack.c.b16 %v675, %v672
    %v937 = vpack.c.b16 %v676, %v673
    %v938 = vpack.c.b16 %v677, %v674
    %v939 = vpack.c.b16 %v681, %v678
    %v940 = vpack.c.b16 %v682, %v679
    %v941 = vpack.c.b16 %v683, %v680
    %v942 = vpack.c.b16 %v687, %v684
    %v943 = vpack.c.b16 %v688, %v685
    %v944 = vpack.c.b16 %v689, %v686
    %v945 = vpack.c.b16 %v693, %v690
    %v946 = vpack.c.b16 %v694, %v691
    %v947 = vpack.c.b16 %v695, %v692
    %v948 = vpack.c.b16 %v699, %v696
    %v949 = vpack.c.b16 %v700, %v697
    %v950 = vpack.c.b16 %v701, %v698
    %v951 = vpack.c.b16 %v705, %v702
    %v952 = vpack.c.b16 %v706, %v703
    %v953 = vpack.c.b16 %v707, %v704
    %v954 = vpack.c.b16 %v711, %v708
    %v955 = vpack.c.b16 %v712, %v709
    %v956 = vpack.c.b16 %v713, %v710
    %v957 = vpack.c.b16 %v717, %v714
    %v958 = vpack.c.b16 %v718, %v715
    %v959 = vpack.c.b16 %v719, %v716
    %v960 = vpack.c.b16 %v723, %v720
    %v961 = vpack.c.b16 %v724, %v721
    %v962 = vpack.c.b16 %v725, %v722
    %v963 = vpack.c.b16 %v729, %v726
    %v964 = vpack.c.b16 %v730, %v727
    %v965 = vpack.c.b16 %v731, %v728
    %v966 = vpack.c.b16 %v735, %v732
    %v967 = vpack.c.b16 %v736, %v733
    %v968 = vpack.c.b16 %v737, %v734
    %v969 = vpack.c.b16 %v741, %v738
    %v970 = vpack.c.b16 %v742, %v739
    %v971 = vpack.c.b16 %v743, %v740
    %v972 = vpack.c.b16 %v747, %v744
    %v973 = vpack.c.b16 %v748, %v745
    %v974 = vpack.c.b16 %v749, %v746
    %v975 = vpack.c.b16 %v753, %v750
    %v976 = vpack.c.b16 %v754, %v751
    %v977 = vpack.c.b16 %v755, %v752
    %v978 = vpack.c.b16 %v759, %v756
    %v979 = vpack.c.b16 %v760, %v757
    %v980 = vpack.c.b16 %v761, %v758
    %v981 = vpack.c.b16 %v765, %v762
    %v982 = vpack.c.b16 %v766, %v763
    %v983 = vpack.c.b16 %v767, %v764
    %v984 = vpack.c.b16 %v771, %v768
    %v985 = vpack.c.b16 %v772, %v769
    %v986 = vpack.c.b16 %v773, %v770
    %v987 = vpack.c.b16 %v777, %v774
    %v988 = vpack.c.b16 %v778, %v775
    %v989 = vpack.c.b16 %v779, %v776
    %v990 = vpack.c.b16 %v783, %v780
    %v991 = vpack.c.b16 %v784, %v781
    %v992 = vpack.c.b16 %v785, %v782
    %v993 = vpack.c.b16 %v789, %v786
    %v994 = vpack.c.b16 %v790, %v787
    %v995 = vpack.c.b16 %v791, %v788
    %v996 = vpack.c.b16 %v795, %v792
    %v997 = vpack.c.b16 %v796, %v793
    %v998 = vpack.c.b16 %v797, %v794
    %v999 = vpack.c.b16 %v801, %v798
    %v1000 = vpack.c.b16 %v802, %v799
    %v1001 = vpack.c.b16 %v803, %v800
    %v1002 = vpack.c.b16 %v807, %v804
    %v1003 = vpack.c.b16 %v808, %v805
    %v1004 = vpack.c.b16 %v809, %v806
    %v1005 = vpack.c.b16 %v813, %v810
    %v1006 = vpack.c.b16 %v814, %v811
    %v1007 = vpack.c.b16 %v815, %v812
    %v1008 = vpack.c.b16 %v819, %v816
    %v1009 = vpack.c.b16 %v820, %v817
    %v1010 = vpack.c.b16 %v821, %v818
    %v1011 = vpack.c.b16 %v825, %v822
    %v1012 = vpack.c.b16 %v826, %v823
    %v1013 = vpack.c.b16 %v827, %v824
    %v1014 = vpack.c.b16 %v831, %v828
    %v1015 = vpack.c.b16 %v832, %v829
    %v1016 = vpack.c.b16 %v833, %v830
    %v1017 = vpack.c.b16 %v837, %v834
    %v1018 = vpack.c.b16 %v838, %v835
    %v1019 = vpack.c.b16 %v839, %v836
    %v1020 = vpack.c.b16 %v843, %v840
    %v1021 = vpack.c.b16 %v844, %v841
    %v1022 = vpack.c.b16 %v845, %v842
    %v1023 = vpack.c.b16 %v849, %v846
    %v1024 = vpack.c.b16 %v850, %v847
    %v1025 = vpack.c.b16 %v851, %v848
    %v1026 = vpack.c.b16 %v855, %v852
    %v1027 = vpack.c.b16 %v856, %v853
    %v1028 = vpack.c.b16 %v857, %v854
    %v1029 = vpack.c.b16 %v858, %v858
    %v1030 = vpack.c.b16 %v859, %v859
    %v1031 = vpack.c.b16 %v860, %v860
    %vm1200 = vcmask 31744
    %v1202 = vsel %vm1200, %v288, 0
    %vm1204 = vcmask 1041408
    %v1206 = vsel %vm1204, %v1029, 0
    %v1209 = vsel %vm1204, %v1030, 0
    %v1212 = vsel %vm1204, %v1031, 0
    %1214 = vmatprep.subr.bf16.mxu0 %v862
    %1215 = vmatpush1.bf16.msra.mxu0 %v861
    %1216 = vmatprep.subr.bf16.mxu0 %v865
    %1217 = vmatpush1.bf16.msra.mxu0 %v864
    %1218 = vmatprep.subr.bf16.mxu0 %v868
    %1219 = vmatpush1.bf16.msra.mxu0 %v867
    %1220 = vmatprep.subr.bf16.mxu0 %v871
    %1221 = vmatpush1.bf16.msra.mxu0 %v870
    %1222 = vmatprep.subr.bf16.mxu0 %v874
    %1223 = vmatpush1.bf16.msra.mxu0 %v873
    %1224 = vmatprep.subr.bf16.mxu0 %v877
    %1225 = vmatpush1.bf16.msra.mxu0 %v876
    %1226 = vmatprep.subr.bf16.mxu0 %v880
    %1227 = vmatpush1.bf16.msra.mxu0 %v879
    %1228 = vmatprep.subr.bf16.mxu0 %v883
    %1229 = vmatpush1.bf16.msra.mxu0 %v882
    %1230 = vmatprep.subr.bf16.mxu0 %v886
    %1231 = vmatpush1.bf16.msra.mxu0 %v885
    %1232 = vmatprep.subr.bf16.mxu0 %v889
    %1233 = vmatpush1.bf16.msra.mxu0 %v888
    %1234 = vmatprep.subr.bf16.mxu0 %v892
    %1235 = vmatpush1.bf16.msra.mxu0 %v891
    %1236 = vmatprep.subr.bf16.mxu0 %v895
    %1237 = vmatpush1.bf16.msra.mxu0 %v894
    %1238 = vmatprep.subr.bf16.mxu0 %v898
    %1239 = vmatpush1.bf16.msra.mxu0 %v897
    %1240 = vmatprep.subr.bf16.mxu0 %v901
    %1241 = vmatpush1.bf16.msra.mxu0 %v900
    %1242 = vmatprep.subr.bf16.mxu0 %v904
    %1243 = vmatpush1.bf16.msra.mxu0 %v903
    %1244 = vmatprep.subr.bf16.mxu0 %v907
    %1245 = vmatpush1.bf16.msra.mxu0 %v906
    %1246 = vmatprep.mubr.bf16.mxu0 %v282
    %1247 = vmatmul.mubr.bf16.gmra.mrb[0].mxu0 %v281
    %v1248 = vpop.f32.mrb[0].mxu0
    %v1249 = vadd.f32 %v257, %v1248
    %v1250 = vpop.f32.mrb[0].mxu0
    %v1251 = vadd.f32 %v261, %v1250
    %v1252 = vpop.f32.mrb[0].mxu0
    %v1253 = vpop.f32.mrb[0].mxu0
    %1254 = vdwg.mxu0
    %1255 = vmatprep.subr.bf16.mxu0 %v910
    %1256 = vmatpush1.bf16.msra.mxu0 %v909
    %1257 = vmatprep.subr.bf16.mxu0 %v913
    %1258 = vmatpush1.bf16.msra.mxu0 %v912
    %1259 = vmatprep.subr.bf16.mxu0 %v916
    %1260 = vmatpush1.bf16.msra.mxu0 %v915
    %1261 = vmatprep.subr.bf16.mxu0 %v919
    %1262 = vmatpush1.bf16.msra.mxu0 %v918
    %1263 = vmatprep.subr.bf16.mxu0 %v922
    %1264 = vmatpush1.bf16.msra.mxu0 %v921
    %1265 = vmatprep.subr.bf16.mxu0 %v925
    %1266 = vmatpush1.bf16.msra.mxu0 %v924
    %1267 = vmatprep.subr.bf16.mxu0 %v928
    %1268 = vmatpush1.bf16.msra.mxu0 %v927
    %1269 = vmatprep.subr.bf16.mxu0 %v931
    %1270 = vmatpush1.bf16.msra.mxu0 %v930
    %1271 = vmatprep.subr.bf16.mxu0 %v934
    %1272 = vmatpush1.bf16.msra.mxu0 %v933
    %1273 = vmatprep.subr.bf16.mxu0 %v937
    %1274 = vmatpush1.bf16.msra.mxu0 %v936
    %1275 = vmatprep.subr.bf16.mxu0 %v940
    %1276 = vmatpush1.bf16.msra.mxu0 %v939
    %1277 = vmatprep.subr.bf16.mxu0 %v943
    %1278 = vmatpush1.bf16.msra.mxu0 %v942
    %1279 = vmatprep.subr.bf16.mxu0 %v946
    %1280 = vmatpush1.bf16.msra.mxu0 %v945
    %1281 = vmatprep.subr.bf16.mxu0 %v949
    %1282 = vmatpush1.bf16.msra.mxu0 %v948
    %1283 = vmatprep.subr.bf16.mxu0 %v952
    %1284 = vmatpush1.bf16.msra.mxu0 %v951
    %1285 = vmatprep.subr.bf16.mxu0 %v955
    %1286 = vmatpush1.bf16.msra.mxu0 %v954
    %1287 = vmatprep.mubr.bf16.mxu0 %v284
    %1288 = vmatmul.mubr.bf16.gmra.mrb[0].mxu0 %v283
    %v1289 = vpop.f32.mrb[0].mxu0
    %v1290 = vadd.f32 %v1249, %v1289
    %v1291 = vpop.f32.mrb[0].mxu0
    %v1292 = vadd.f32 %v1251, %v1291
    %v1293 = vpop.f32.mrb[0].mxu0
    %v1294 = vpop.f32.mrb[0].mxu0
    %1295 = vdwg.mxu0
    %1296 = vmatprep.subr.bf16.mxu0 %v958
    %1297 = vmatpush1.bf16.msra.mxu0 %v957
    %1298 = vmatprep.subr.bf16.mxu0 %v961
    %1299 = vmatpush1.bf16.msra.mxu0 %v960
    %1300 = vmatprep.subr.bf16.mxu0 %v964
    %1301 = vmatpush1.bf16.msra.mxu0 %v963
    %1302 = vmatprep.subr.bf16.mxu0 %v967
    %1303 = vmatpush1.bf16.msra.mxu0 %v966
    %1304 = vmatprep.subr.bf16.mxu0 %v970
    %1305 = vmatpush1.bf16.msra.mxu0 %v969
    %1306 = vmatprep.subr.bf16.mxu0 %v973
    %1307 = vmatpush1.bf16.msra.mxu0 %v972
    %1308 = vmatprep.subr.bf16.mxu0 %v976
    %1309 = vmatpush1.bf16.msra.mxu0 %v975
    %1310 = vmatprep.subr.bf16.mxu0 %v979
    %1311 = vmatpush1.bf16.msra.mxu0 %v978
    %1312 = vmatprep.subr.bf16.mxu0 %v982
    %1313 = vmatpush1.bf16.msra.mxu0 %v981
    %1314 = vmatprep.subr.bf16.mxu0 %v985
    %1315 = vmatpush1.bf16.msra.mxu0 %v984
    %1316 = vmatprep.subr.bf16.mxu0 %v988
    %1317 = vmatpush1.bf16.msra.mxu0 %v987
    %1318 = vmatprep.subr.bf16.mxu0 %v991
    %1319 = vmatpush1.bf16.msra.mxu0 %v990
    %1320 = vmatprep.subr.bf16.mxu0 %v994
    %1321 = vmatpush1.bf16.msra.mxu0 %v993
    %1322 = vmatprep.subr.bf16.mxu0 %v997
    %1323 = vmatpush1.bf16.msra.mxu0 %v996
    %1324 = vmatprep.subr.bf16.mxu0 %v1000
    %1325 = vmatpush1.bf16.msra.mxu0 %v999
    %1326 = vmatprep.subr.bf16.mxu0 %v1003
    %1327 = vmatpush1.bf16.msra.mxu0 %v1002
    %1328 = vmatprep.mubr.bf16.mxu0 %v286
    %1329 = vmatmul.mubr.bf16.gmra.mrb[0].mxu0 %v285
    %v1330 = vpop.f32.mrb[0].mxu0
    %v1331 = vadd.f32 %v1290, %v1330
    %v1332 = vpop.f32.mrb[0].mxu0
    %v1333 = vadd.f32 %v1292, %v1332
    %v1334 = vpop.f32.mrb[0].mxu0
    %v1335 = vpop.f32.mrb[0].mxu0
    %1336 = vdwg.mxu0
    %1337 = vmatprep.subr.bf16.mxu0 %v1006
    %1338 = vmatpush1.bf16.msra.mxu0 %v1005
    %1339 = vmatprep.subr.bf16.mxu0 %v1009
    %1340 = vmatpush1.bf16.msra.mxu0 %v1008
    %1341 = vmatprep.subr.bf16.mxu0 %v1012
    %1342 = vmatpush1.bf16.msra.mxu0 %v1011
    %1343 = vmatprep.subr.bf16.mxu0 %v1015
    %1344 = vmatpush1.bf16.msra.mxu0 %v1014
    %1345 = vmatprep.subr.bf16.mxu0 %v1018
    %1346 = vmatpush1.bf16.msra.mxu0 %v1017
    %1347 = vmatprep.subr.bf16.mxu0 %v1021
    %1348 = vmatpush1.bf16.msra.mxu0 %v1020
    %1349 = vmatprep.subr.bf16.mxu0 %v1024
    %1350 = vmatpush1.bf16.msra.mxu0 %v1023
    %1351 = vmatprep.subr.bf16.mxu0 %v1027
    %1352 = vmatpush1.bf16.msra.mxu0 %v1026
    %1353 = vmatprep.subr.bf16.mxu0 %v1209
    %1354 = vmatpush1.bf16.msra.mxu0 %v1206
    %1355 = vmatprep.subr.bf16.mxu0 0
    %1356 = vmatpush1.bf16.msra.mxu0 0
    %1357 = vmatprep.subr.bf16.mxu0 0
    %1358 = vmatpush1.bf16.msra.mxu0 0
    %1359 = vmatprep.subr.bf16.mxu0 0
    %1360 = vmatpush1.bf16.msra.mxu0 0
    %1361 = vmatprep.subr.bf16.mxu0 0
    %1362 = vmatpush1.bf16.msra.mxu0 0
    %1363 = vmatprep.subr.bf16.mxu0 0
    %1364 = vmatpush1.bf16.msra.mxu0 0
    %1365 = vmatprep.subr.bf16.mxu0 0
    %1366 = vmatpush1.bf16.msra.mxu0 0
    %1367 = vmatprep.subr.bf16.mxu0 0
    %1368 = vmatpush1.bf16.msra.mxu0 0
    %1369 = vmatprep.mubr.bf16.mxu0 %v1202
    %1370 = vmatmul.mubr.bf16.gmra.mrb[0].mxu0 %v287
    %v1371 = vpop.f32.mrb[0].mxu0
    %v1372 = vadd.f32 %v1331, %v1371
    %v1373 = vpop.f32.mrb[0].mxu0
    %v1374 = vadd.f32 %v1333, %v1373
    %v1375 = vpop.f32.mrb[0].mxu0
    %v1376 = vpop.f32.mrb[0].mxu0
    %1377 = vdwg.mxu0
    %1378 = vmatprep.subr.bf16.mxu0 0
    %1379 = vmatpush1.bf16.msra.mxu0 %v863
    %1380 = vmatprep.subr.bf16.mxu0 0
    %1381 = vmatpush1.bf16.msra.mxu0 %v866
    %1382 = vmatprep.subr.bf16.mxu0 0
    %1383 = vmatpush1.bf16.msra.mxu0 %v869
    %1384 = vmatprep.subr.bf16.mxu0 0
    %1385 = vmatpush1.bf16.msra.mxu0 %v872
    %1386 = vmatprep.subr.bf16.mxu0 0
    %1387 = vmatpush1.bf16.msra.mxu0 %v875
    %1388 = vmatprep.subr.bf16.mxu0 0
    %1389 = vmatpush1.bf16.msra.mxu0 %v878
    %1390 = vmatprep.subr.bf16.mxu0 0
    %1391 = vmatpush1.bf16.msra.mxu0 %v881
    %1392 = vmatprep.subr.bf16.mxu0 0
    %1393 = vmatpush1.bf16.msra.mxu0 %v884
    %1394 = vmatprep.subr.bf16.mxu0 0
    %1395 = vmatpush1.bf16.msra.mxu0 %v887
    %1396 = vmatprep.subr.bf16.mxu0 0
    %1397 = vmatpush1.bf16.msra.mxu0 %v890
    %1398 = vmatprep.subr.bf16.mxu0 0
    %1399 = vmatpush1.bf16.msra.mxu0 %v893
    %1400 = vmatprep.subr.bf16.mxu0 0
    %1401 = vmatpush1.bf16.msra.mxu0 %v896
    %1402 = vmatprep.subr.bf16.mxu0 0
    %1403 = vmatpush1.bf16.msra.mxu0 %v899
    %1404 = vmatprep.subr.bf16.mxu0 0
    %1405 = vmatpush1.bf16.msra.mxu0 %v902
    %1406 = vmatprep.subr.bf16.mxu0 0
    %1407 = vmatpush1.bf16.msra.mxu0 %v905
    %1408 = vmatprep.subr.bf16.mxu0 0
    %1409 = vmatpush1.bf16.msra.mxu0 %v908
    %1410 = vmatprep.mubr.bf16.mxu0 %v282
    %1411 = vmatmul.mubr.bf16.gmra.mrb[0].mxu0 %v281
    %v1412 = vpop.f32.mrb[0].mxu0
    %v1413 = vadd.f32 %v265, %v1412
    %v1414 = vpop.f32.mrb[0].mxu0
    %v1415 = vpop.f32.mrb[0].mxu0
    %v1416 = vpop.f32.mrb[0].mxu0
    %1417 = vdwg.mxu0
    %1418 = vmatprep.subr.bf16.mxu0 0
    %1419 = vmatpush1.bf16.msra.mxu0 %v911
    %1420 = vmatprep.subr.bf16.mxu0 0
    %1421 = vmatpush1.bf16.msra.mxu0 %v914
    %1422 = vmatprep.subr.bf16.mxu0 0
    %1423 = vmatpush1.bf16.msra.mxu0 %v917
    %1424 = vmatprep.subr.bf16.mxu0 0
    %1425 = vmatpush1.bf16.msra.mxu0 %v920
    %1426 = vmatprep.subr.bf16.mxu0 0
    %1427 = vmatpush1.bf16.msra.mxu0 %v923
    %1428 = vmatprep.subr.bf16.mxu0 0
    %1429 = vmatpush1.bf16.msra.mxu0 %v926
    %1430 = vmatprep.subr.bf16.mxu0 0
    %1431 = vmatpush1.bf16.msra.mxu0 %v929
    %1432 = vmatprep.subr.bf16.mxu0 0
    %1433 = vmatpush1.bf16.msra.mxu0 %v932
    %1434 = vmatprep.subr.bf16.mxu0 0
    %1435 = vmatpush1.bf16.msra.mxu0 %v935
    %1436 = vmatprep.subr.bf16.mxu0 0
    %1437 = vmatpush1.bf16.msra.mxu0 %v938
    %1438 = vmatprep.subr.bf16.mxu0 0
    %1439 = vmatpush1.bf16.msra.mxu0 %v941
    %1440 = vmatprep.subr.bf16.mxu0 0
    %1441 = vmatpush1.bf16.msra.mxu0 %v944
    %1442 = vmatprep.subr.bf16.mxu0 0
    %1443 = vmatpush1.bf16.msra.mxu0 %v947
    %1444 = vmatprep.subr.bf16.mxu0 0
    %1445 = vmatpush1.bf16.msra.mxu0 %v950
    %1446 = vmatprep.subr.bf16.mxu0 0
    %1447 = vmatpush1.bf16.msra.mxu0 %v953
    %1448 = vmatprep.subr.bf16.mxu0 0
    %1449 = vmatpush1.bf16.msra.mxu0 %v956
    %1450 = vmatprep.mubr.bf16.mxu0 %v284
    %1451 = vmatmul.mubr.bf16.gmra.mrb[0].mxu0 %v283
    %v1452 = vpop.f32.mrb[0].mxu0
    %v1453 = vadd.f32 %v1413, %v1452
    %v1454 = vpop.f32.mrb[0].mxu0
    %v1455 = vpop.f32.mrb[0].mxu0
    %v1456 = vpop.f32.mrb[0].mxu0
    %1457 = vdwg.mxu0
    %1458 = vmatprep.subr.bf16.mxu0 0
    %1459 = vmatpush1.bf16.msra.mxu0 %v959
    %1460 = vmatprep.subr.bf16.mxu0 0
    %1461 = vmatpush1.bf16.msra.mxu0 %v962
    %1462 = vmatprep.subr.bf16.mxu0 0
    %1463 = vmatpush1.bf16.msra.mxu0 %v965
    %1464 = vmatprep.subr.bf16.mxu0 0
    %1465 = vmatpush1.bf16.msra.mxu0 %v968
    %1466 = vmatprep.subr.bf16.mxu0 0
    %1467 = vmatpush1.bf16.msra.mxu0 %v971
    %1468 = vmatprep.subr.bf16.mxu0 0
    %1469 = vmatpush1.bf16.msra.mxu0 %v974
    %1470 = vmatprep.subr.bf16.mxu0 0
    %1471 = vmatpush1.bf16.msra.mxu0 %v977
    %1472 = vmatprep.subr.bf16.mxu0 0
    %1473 = vmatpush1.bf16.msra.mxu0 %v980
    %1474 = vmatprep.subr.bf16.mxu0 0
    %1475 = vmatpush1.bf16.msra.mxu0 %v983
    %1476 = vmatprep.subr.bf16.mxu0 0
    %1477 = vmatpush1.bf16.msra.mxu0 %v986
    %1478 = vmatprep.subr.bf16.mxu0 0
    %1479 = vmatpush1.bf16.msra.mxu0 %v989
    %1480 = vmatprep.subr.bf16.mxu0 0
    %1481 = vmatpush1.bf16.msra.mxu0 %v992
    %1482 = vmatprep.subr.bf16.mxu0 0
    %1483 = vmatpush1.bf16.msra.mxu0 %v995
    %1484 = vmatprep.subr.bf16.mxu0 0
    %1485 = vmatpush1.bf16.msra.mxu0 %v998
    %1486 = vmatprep.subr.bf16.mxu0 0
    %1487 = vmatpush1.bf16.msra.mxu0 %v1001
    %1488 = vmatprep.subr.bf16.mxu0 0
    %1489 = vmatpush1.bf16.msra.mxu0 %v1004
    %1490 = vmatprep.mubr.bf16.mxu0 %v286
    %1491 = vmatmul.mubr.bf16.gmra.mrb[0].mxu0 %v285
    %v1492 = vpop.f32.mrb[0].mxu0
    %v1493 = vadd.f32 %v1453, %v1492
    %v1494 = vpop.f32.mrb[0].mxu0
    %v1495 = vpop.f32.mrb[0].mxu0
    %v1496 = vpop.f32.mrb[0].mxu0
    %1497 = vdwg.mxu0
    %1498 = vmatprep.subr.bf16.mxu0 0
    %1499 = vmatpush1.bf16.msra.mxu0 %v1007
    %1500 = vmatprep.subr.bf16.mxu0 0
    %1501 = vmatpush1.bf16.msra.mxu0 %v1010
    %1502 = vmatprep.subr.bf16.mxu0 0
    %1503 = vmatpush1.bf16.msra.mxu0 %v1013
    %1504 = vmatprep.subr.bf16.mxu0 0
    %1505 = vmatpush1.bf16.msra.mxu0 %v1016
    %1506 = vmatprep.subr.bf16.mxu0 0
    %1507 = vmatpush1.bf16.msra.mxu0 %v1019
    %1508 = vmatprep.subr.bf16.mxu0 0
    %1509 = vmatpush1.bf16.msra.mxu0 %v1022
    %1510 = vmatprep.subr.bf16.mxu0 0
    %1511 = vmatpush1.bf16.msra.mxu0 %v1025
    %1512 = vmatprep.subr.bf16.mxu0 0
    %1513 = vmatpush1.bf16.msra.mxu0 %v1028
    %1514 = vmatprep.subr.bf16.mxu0 0
    %1515 = vmatpush1.bf16.msra.mxu0 %v1212
    %1516 = vmatprep.subr.bf16.mxu0 0
    %1517 = vmatpush1.bf16.msra.mxu0 0
    %1518 = vmatprep.subr.bf16.mxu0 0
    %1519 = vmatpush1.bf16.msra.mxu0 0
    %1520 = vmatprep.subr.bf16.mxu0 0
    %1521 = vmatpush1.bf16.msra.mxu0 0
    %1522 = vmatprep.subr.bf16.mxu0 0
    %1523 = vmatpush1.bf16.msra.mxu0 0
    %1524 = vmatprep.subr.bf16.mxu0 0
    %1525 = vmatpush1.bf16.msra.mxu0 0
    %1526 = vmatprep.subr.bf16.mxu0 0
    %1527 = vmatpush1.bf16.msra.mxu0 0
    %1528 = vmatprep.subr.bf16.mxu0 0
    %1529 = vmatpush1.bf16.msra.mxu0 0
    %1530 = vmatprep.mubr.bf16.mxu0 %v1202
    %1531 = vmatmul.mubr.bf16.gmra.mrb[0].mxu0 %v287
    %v1532 = vpop.f32.mrb[0].mxu0
    %v1533 = vadd.f32 %v1493, %v1532
    %v1534 = vpop.f32.mrb[0].mxu0
    %v1535 = vpop.f32.mrb[0].mxu0
    %v1536 = vpop.f32.mrb[0].mxu0
    %1537 = vdwg.mxu0
    %v1538 = vmax.f32 %v1372, 0.0
    %v1539 = vmax.f32 %v1374, 0.0
    %v1540 = vmax.f32 %v1533, 0.0
    %v1541 = vld [vmem:[%s3] sm:$0xff]
    %v1542 = vld [vmem:[%s3 + $0x8] sm:$0xff]
    %v1543 = vld [vmem:[%s3 + $0x10] sm:$0xff]
    %v1544 = vld [vmem:[%s3 + $0x18] sm:$0xff]
    %v1545 = vld [vmem:[%s3 + $0x20] sm:$0xff]
    %v1546 = vld [vmem:[%s3 + $0x28] sm:$0xff]
    %v1547 = vld [vmem:[%s3 + $0x30] sm:$0xff]
    %v1548 = vld [vmem:[%s3 + $0x38] sm:$0xff]
    %v1549 = vld [vmem:[%s3 + $0x40] sm:$0xff]
    %v1550 = vld [vmem:[%s3 + $0x48] sm:$0xff]
    %v1551 = vld [vmem:[%s3 + $0x50] sm:$0xff]
    %v1552 = vld [vmem:[%s3 + $0x58] sm:$0xff]
    %v1553 = vld [vmem:[%s3 + $0x60] sm:$0xff]
    %v1554 = vld [vmem:[%s3 + $0x68] sm:$0xff]
    %v1555 = vld [vmem:[%s3 + $0x70] sm:$0xff]
    %v1556 = vld [vmem:[%s3 + $0x78] sm:$0xff]
    %v1557 = vld [vmem:[%s3 + $0x80] sm:$0xff]
    %v1558 = vld [vmem:[%s3 + $0x88] sm:$0xff]
    %v1559 = vld [vmem:[%s3 + $0x90] sm:$0xff]
    %v1560 = vld [vmem:[%s3 + $0x98] sm:$0xff]
    %v1561 = vld [vmem:[%s3 + $0xa0] sm:$0xff]
    %v1562 = vld [vmem:[%s3 + $0xa8] sm:$0xff]
    %v1563 = vld [vmem:[%s3 + $0xb0] sm:$0xff]
    %v1564 = vld [vmem:[%s3 + $0xb8] sm:$0xff]
    %v1565 = vld [vmem:[%s3 + $0xc0] sm:$0xff]
    %v1566 = vld [vmem:[%s3 + $0xc8] sm:$0xff]
    %v1567 = vld [vmem:[%s3 + $0xd0] sm:$0xff]
    %v1568 = vld [vmem:[%s3 + $0xd8] sm:$0xff]
    %v1569 = vld [vmem:[%s3 + $0xe0] sm:$0xff]
    %v1570 = vld [vmem:[%s3 + $0xe8] sm:$0xff]
    %v1571 = vld [vmem:[%s3 + $0xf0] sm:$0xff]
    %v1572 = vld [vmem:[%s3 + $0xf8] sm:$0xff]
    %v1573 = vld [vmem:[%s3 + $0x100] sm:$0xff]
    %v1574 = vld [vmem:[%s3 + $0x108] sm:$0xff]
    %v1575 = vld [vmem:[%s3 + $0x110] sm:$0xff]
    %v1576 = vld [vmem:[%s3 + $0x118] sm:$0xff]
    %v1577 = vld [vmem:[%s3 + $0x120] sm:$0xff]
    %v1578 = vld [vmem:[%s3 + $0x128] sm:$0xf]
    %v1579 = vld [vmem:[%s4] sm:$0x1]
    %v1581 = vlaneseq
    %v1582 = vshrl.u32 %v1581, 7
    %v1583 = vsub.s32 0, %v1582
    %v1584 = vrot.slane %v1579, %v1583
    %vm1586 = vcmask 359424
    %v1588 = vsel %vm1586, %v1540, 0
    %vm1590 = vcmask 1043456
    %v1592 = vsel %vm1590, %v1578, 0
    %1594 = vmatprep.subr.mxu0 0.0
    %1595 = vmatpush1.msra.mxu0 %v1541
    %1596 = vmatprep.subr.mxu0 0.0
    %1597 = vmatpush1.msra.mxu0 %v1542
    %1598 = vmatprep.subr.mxu0 0.0
    %1599 = vmatpush1.msra.mxu0 %v1543
    %1600 = vmatprep.subr.mxu0 0.0
    %1601 = vmatpush1.msra.mxu0 %v1544
    %1602 = vmatprep.subr.mxu0 0.0
    %1603 = vmatpush1.msra.mxu0 %v1545
    %1604 = vmatprep.subr.mxu0 0.0
    %1605 = vmatpush1.msra.mxu0 %v1546
    %1606 = vmatprep.subr.mxu0 0.0
    %1607 = vmatpush1.msra.mxu0 %v1547
    %1608 = vmatprep.subr.mxu0 0.0
    %1609 = vmatpush1.msra.mxu0 %v1548
    %1610 = vmatprep.subr.mxu0 0.0
    %1611 = vmatpush1.msra.mxu0 %v1549
    %1612 = vmatprep.subr.mxu0 0.0
    %1613 = vmatpush1.msra.mxu0 %v1550
    %1614 = vmatprep.subr.mxu0 0.0
    %1615 = vmatpush1.msra.mxu0 %v1551
    %1616 = vmatprep.subr.mxu0 0.0
    %1617 = vmatpush1.msra.mxu0 %v1552
    %1618 = vmatprep.subr.mxu0 0.0
    %1619 = vmatpush1.msra.mxu0 %v1553
    %1620 = vmatprep.subr.mxu0 0.0
    %1621 = vmatpush1.msra.mxu0 %v1554
    %1622 = vmatprep.subr.mxu0 0.0
    %1623 = vmatpush1.msra.mxu0 %v1555
    %1624 = vmatprep.subr.mxu0 0.0
    %1625 = vmatpush1.msra.mxu0 %v1556
    %1626 = vmatprep.subr.mxu0 0.0
    %1627 = vmatpush1.msra.mxu0 %v1557
    %1628 = vmatprep.subr.mxu0 0.0
    %1629 = vmatpush1.msra.mxu0 %v1558
    %1630 = vmatprep.subr.mxu0 0.0
    %1631 = vmatpush1.msra.mxu0 %v1559
    %1632 = vmatprep.subr.mxu0 0.0
    %1633 = vmatpush1.msra.mxu0 %v1560
    %1634 = vmatprep.subr.mxu0 0.0
    %1635 = vmatpush1.msra.mxu0 %v1561
    %1636 = vmatprep.subr.mxu0 0.0
    %1637 = vmatpush1.msra.mxu0 %v1562
    %1638 = vmatprep.subr.mxu0 0.0
    %1639 = vmatpush1.msra.mxu0 %v1563
    %1640 = vmatprep.subr.mxu0 0.0
    %1641 = vmatpush1.msra.mxu0 %v1564
    %1642 = vmatprep.subr.mxu0 0.0
    %1643 = vmatpush1.msra.mxu0 %v1565
    %1644 = vmatprep.subr.mxu0 0.0
    %1645 = vmatpush1.msra.mxu0 %v1566
    %1646 = vmatprep.subr.mxu0 0.0
    %1647 = vmatpush1.msra.mxu0 %v1567
    %1648 = vmatprep.subr.mxu0 0.0
    %1649 = vmatpush1.msra.mxu0 %v1568
    %1650 = vmatprep.subr.mxu0 0.0
    %1651 = vmatpush1.msra.mxu0 %v1569
    %1652 = vmatprep.subr.mxu0 0.0
    %1653 = vmatpush1.msra.mxu0 %v1570
    %1654 = vmatprep.subr.mxu0 0.0
    %1655 = vmatpush1.msra.mxu0 %v1571
    %1656 = vmatprep.subr.mxu0 0.0
    %1657 = vmatpush1.msra.mxu0 %v1572
    %1658 = vmatprep.mubr.f32.mxu0 %v1539
    %1659 = vmatmul.mubr.f32.gmra.mrb[0].mxu0 %v1538
    %v1660 = vpop.f32.mrb[0].mxu0
    %v1661 = vadd.f32 %v1584, %v1660
    %v1662 = vpop.f32.mrb[0].mxu0
    %1663 = vdwg.mxu0
    %1664 = vmatprep.subr.mxu0 0.0
    %1665 = vmatpush1.msra.mxu0 %v1573
    %1666 = vmatprep.subr.mxu0 0.0
    %1667 = vmatpush1.msra.mxu0 %v1574
    %1668 = vmatprep.subr.mxu0 0.0
    %1669 = vmatpush1.msra.mxu0 %v1575
    %1670 = vmatprep.subr.mxu0 0.0
    %1671 = vmatpush1.msra.mxu0 %v1576
    %1672 = vmatprep.subr.mxu0 0.0
    %1673 = vmatpush1.msra.mxu0 %v1577
    %1674 = vmatprep.subr.mxu0 0.0
    %1675 = vmatpush1.msra.mxu0 %v1592
    %1676 = vmatprep.subr.mxu0 0.0
    %1677 = vmatpush1.msra.mxu0 0.0
    %1678 = vmatprep.subr.mxu0 0.0
    %1679 = vmatpush1.msra.mxu0 0.0
    %1680 = vmatprep.subr.mxu0 0.0
    %1681 = vmatpush1.msra.mxu0 0.0
    %1682 = vmatprep.subr.mxu0 0.0
    %1683 = vmatpush1.msra.mxu0 0.0
    %1684 = vmatprep.subr.mxu0 0.0
    %1685 = vmatpush1.msra.mxu0 0.0
    %1686 = vmatprep.subr.mxu0 0.0
    %1687 = vmatpush1.msra.mxu0 0.0
    %1688 = vmatprep.subr.mxu0 0.0
    %1689 = vmatpush1.msra.mxu0 0.0
    %1690 = vmatprep.subr.mxu0 0.0
    %1691 = vmatpush1.msra.mxu0 0.0
    %1692 = vmatprep.subr.mxu0 0.0
    %1693 = vmatpush1.msra.mxu0 0.0
    %1694 = vmatprep.subr.mxu0 0.0
    %1695 = vmatpush1.msra.mxu0 0.0
    %1696 = vmatprep.subr.mxu0 0.0
    %1697 = vmatpush1.msra.mxu0 0.0
    %1698 = vmatprep.subr.mxu0 0.0
    %1699 = vmatpush1.msra.mxu0 0.0
    %1700 = vmatprep.subr.mxu0 0.0
    %1701 = vmatpush1.msra.mxu0 0.0
    %1702 = vmatprep.subr.mxu0 0.0
    %1703 = vmatpush1.msra.mxu0 0.0
    %1704 = vmatprep.subr.mxu0 0.0
    %1705 = vmatpush1.msra.mxu0 0.0
    %1706 = vmatprep.subr.mxu0 0.0
    %1707 = vmatpush1.msra.mxu0 0.0
    %1708 = vmatprep.subr.mxu0 0.0
    %1709 = vmatpush1.msra.mxu0 0.0
    %1710 = vmatprep.subr.mxu0 0.0
    %1711 = vmatpush1.msra.mxu0 0.0
    %1712 = vmatprep.subr.mxu0 0.0
    %1713 = vmatpush1.msra.mxu0 0.0
    %1714 = vmatprep.subr.mxu0 0.0
    %1715 = vmatpush1.msra.mxu0 0.0
    %1716 = vmatprep.subr.mxu0 0.0
    %1717 = vmatpush1.msra.mxu0 0.0
    %1718 = vmatprep.subr.mxu0 0.0
    %1719 = vmatpush1.msra.mxu0 0.0
    %1720 = vmatprep.subr.mxu0 0.0
    %1721 = vmatpush1.msra.mxu0 0.0
    %1722 = vmatprep.subr.mxu0 0.0
    %1723 = vmatpush1.msra.mxu0 0.0
    %1724 = vmatprep.subr.mxu0 0.0
    %1725 = vmatpush1.msra.mxu0 0.0
    %1726 = vmatprep.subr.mxu0 0.0
    %1727 = vmatpush1.msra.mxu0 0.0
    %1728 = vmatprep.mubr.f32.mxu0 0.0
    %1729 = vmatmul.mubr.f32.gmra.mrb[0].mxu0 %v1588
    %v1730 = vpop.f32.mrb[0].mxu0
    %v1731 = vadd.f32 %v1661, %v1730
    %v1732 = vpop.f32.mrb[0].mxu0
    %1733 = vdwg.mxu0
    %1734 = vst [vmem:[#allocation2] sm:$0xff] %v1731
    // Predicated region
    $region22: #{classification_model_forward.1} parent=1 // pred_check
      _
    $region23: #{classification_model_forward.1} parent=1 // pred_check_branch
      %1736 = sbr.rel (0) target = $region25
    $region24: #{classification_model_forward.1} parent=1 // pred_region
      %s1738 = ssub.s32 128, 128
      %1739 = vsyncadd [#allocation3], %s1738
      %s1741 = sshll.u32 [#allocation2], 4
      %s1742 = int_to_ptr.vmem [resolvable:$true] %s1741
      %1744 = dma.vmem_to_hbm [thread:$0]  %s1742, 128, %s5, [#allocation3]
    $region25: #{classification_model_forward.1} parent=1 // pred_fallthru
      _
    // Predicated region
    $region26: #{classification_model_forward.1} parent=1 // pred_check
      _
    $region27: #{classification_model_forward.1} parent=1 // pred_check_branch
      %1746 = sbr.rel (0) target = $region29
    $region28: #{classification_model_forward.1} parent=1 // pred_region
      %1747 = dma.done [#allocation3], 128
    $region29: #{classification_model_forward.1} parent=1 // pred_fallthru
      _
    %1748 = vsyncpa [#allocation3], 1

</llo_original>
